<compile_context>
chip_gen: v7x
topology: tpu7x:2x2x1
jax: 0.10.0
libtpu: 0.0.40
codegen_flags: <defaults>
</compile_context>

<pallas_src>
import jax
import jax.numpy as jnp
from jax.experimental import pallas as pl
from jax.experimental.pallas import tpu as pltpu

NEG_SLOPE = 0.01     # nn.LeakyReLU default
LANE = 128           # TPU vreg lane width
SUBLANE = 8          # TPU vreg sublane count


def _round_up(n, m):
    return ((n + m - 1) // m) * m


def _cdiv(a, b):
    return -(-a // b)


def _leaky_relu(x):
    # For 0 < slope < 1 this equals where(x > 0, x, slope*x); single vmax on VPU.
    return jnp.maximum(x, NEG_SLOPE * x)


# ----------------------------------------------------------------------------
# Kernel
# ----------------------------------------------------------------------------
def mlp_kernel(x_ref, w1_ref, b1_ref, w2_ref, b2_ref, w3_ref, b3_ref,
               w4_ref, b4_ref, o_ref):
    # x tile: (TM, D_in) f32; weights: bf16; biases: f32; output: (TM, out) f32.
    x = x_ref[...]

    def dot(a_f32, w_ref):
        # bf16 MXU inputs, f32 accumulation.
        return jnp.dot(a_f32.astype(jnp.bfloat16), w_ref[...],
                       preferred_element_type=jnp.float32)

    # base_layers: Linear -> LeakyReLU -> Linear -> LeakyReLU -> Linear
    h = _leaky_relu(dot(x, w1_ref) + b1_ref[...])
    h = _leaky_relu(dot(h, w2_ref) + b2_ref[...])
    h = dot(h, w3_ref) + b3_ref[...]

    # final_layer: LeakyReLU -> Linear
    h = _leaky_relu(h)
    y = dot(h, w4_ref) + b4_ref[...]

    o_ref[...] = y.astype(o_ref.dtype)


# ----------------------------------------------------------------------------
# Params (prepared ONCE at init, cached — not on the forward path)
# ----------------------------------------------------------------------------
def _pad2(a, rows, cols):
    return jnp.pad(a, ((0, rows - a.shape[0]), (0, cols - a.shape[1])))


def prepare_params(params):
    """Zero-pad the hidden dim to a multiple of 128 (lane-dense), cast weights to
    bf16 (biases stay f32).  Input dim and output dim are left at logical size.
    Call once at init and reuse the result every forward pass."""
    d_in, hid = params["w1"].shape
    out = params["w4"].shape[1]
    hp = _round_up(hid, LANE)
    prep = {
        "w1": _pad2(params["w1"], d_in, hp).astype(jnp.bfloat16),
        "b1": _pad2(params["b1"], 1, hp).astype(jnp.float32),
        "w2": _pad2(params["w2"], hp, hp).astype(jnp.bfloat16),
        "b2": _pad2(params["b2"], 1, hp).astype(jnp.float32),
        "w3": _pad2(params["w3"], hp, hp).astype(jnp.bfloat16),
        "b3": _pad2(params["b3"], 1, hp).astype(jnp.float32),
        "w4": _pad2(params["w4"], hp, out).astype(jnp.bfloat16),
        "b4": _pad2(params["b4"], 1, out).astype(jnp.float32),
    }
    return prep


# ----------------------------------------------------------------------------
# Forward wrapper
# ----------------------------------------------------------------------------
def mlp_forward(x, prep, *, tm_max=1024):
    """x: (B, input_size) float32. prep: output of prepare_params (cached)."""
    B, d_in = x.shape
    assert prep["w1"].shape[0] == d_in
    hp = prep["w1"].shape[1]
    out = prep["w4"].shape[1]

    # Balanced batch tiling (review #3): cap pad waste at <= 7 rows per tile,
    # with tiles up to tm_max rows (review #1).
    num_tiles = max(1, _cdiv(B, tm_max))
    tm = _round_up(_cdiv(B, num_tiles), SUBLANE)
    b_pad = tm * num_tiles
    x_p = jnp.pad(x, ((0, b_pad - B), (0, 0))) if b_pad != B else x

    operands = (x_p,
                prep["w1"], prep["b1"],
                prep["w2"], prep["b2"],
                prep["w3"], prep["b3"],
                prep["w4"], prep["b4"])

    # Explicit VMEM budget (review #5): resident weights (worst case 2 buffers),
    # double-buffered x/out tiles, f32 intermediates, plus headroom.
    weight_bytes = sum(int(v.size) * v.dtype.itemsize for v in prep.values())
    vmem_est = (2 * weight_bytes
                + 2 * tm * d_in * 4
                + 2 * tm * out * 4
                + 6 * tm * hp * 4)
    vmem_limit = int(min(128 << 20, max(int(vmem_est * 1.5) + (2 << 20), 16 << 20)))

    flops = 2 * b_pad * (d_in * hp + 2 * hp * hp + hp * out)
    bytes_accessed = int(x_p.size) * 4 + weight_bytes + b_pad * out * 4
    cost = pl.CostEstimate(flops=flops, transcendentals=0,
                           bytes_accessed=bytes_accessed)

    def build(single_buffer_weights):
        def resident(shape):
            # Same block index every grid step -> stays VMEM-resident.
            if single_buffer_weights:
                # No double buffer for never-changing blocks (review #4, v7x VMEM).
                return pl.BlockSpec(shape, lambda i: (0, 0),
                                    pipeline_mode=pl.Buffered(1))
            return pl.BlockSpec(shape, lambda i: (0, 0))

        in_specs = [pl.BlockSpec((tm, d_in), lambda i: (i, 0))]   # batch-tiled input
        in_specs += [resident(arr.shape) for arr in operands[1:]]  # resident params
        # Output block at logical width (last dim == full array dim): no 16x
        # lane-padding writeback inflation (review #2).
        out_spec = pl.BlockSpec((tm, out), lambda i: (i, 0))

        return pl.pallas_call(
            mlp_kernel,
            out_shape=jax.ShapeDtypeStruct((b_pad, out), jnp.float32),
            grid=(num_tiles,),
            in_specs=in_specs,
            out_specs=out_spec,
            compiler_params=pltpu.CompilerParams(
                dimension_semantics=("parallel",),   # shard batch tiles across TCs
                vmem_limit_bytes=vmem_limit),
            cost_estimate=cost,
        )

    try:
        y_pad = build(True)(*operands)
    except Exception:
        # Fallback if this JAX version rejects pipeline_mode=pl.Buffered(1).
        y_pad = build(False)(*operands)

    return y_pad[:B]


# ----------------------------------------------------------------------------
# Init + references
# ----------------------------------------------------------------------------
def init_params(key, input_size, hidden_size, output_size):
    """Deterministic init mimicking torch.nn.Linear (uniform +/- 1/sqrt(fan_in)).
    Weights returned already transposed to (in, out)."""
    def linear(key, fan_in, fan_out):
        kw, kb = jax.random.split(key)
        bound = 1.0 / jnp.sqrt(jnp.float32(fan_in))
        w = jax.random.uniform(kw, (fan_in, fan_out), jnp.float32, -bound, bound)
        b = jax.random.uniform(kb, (1, fan_out), jnp.float32, -bound, bound)
        return w, b

    k1, k2, k3, k4 = jax.random.split(key, 4)
    w1, b1 = linear(k1, input_size, hidden_size)
    w2, b2 = linear(k2, hidden_size, hidden_size)
    w3, b3 = linear(k3, hidden_size, hidden_size)
    w4, b4 = linear(k4, hidden_size, output_size)
    return {"w1": w1, "b1": b1, "w2": w2, "b2": b2,
            "w3": w3, "b3": b3, "w4": w4, "b4": b4}


def mlp_reference_matched(x, prep):
    """Pure-JAX reference with the same bf16-at-dot-input / f32-accumulate math
    as the kernel (tight tolerance)."""
    def dot(a, w):
        return jnp.dot(a.astype(jnp.bfloat16), w, preferred_element_type=jnp.float32)

    h = _leaky_relu(dot(x, prep["w1"]) + prep["b1"])
    h = _leaky_relu(dot(h, prep["w2"]) + prep["b2"])
    h = _leaky_relu(dot(h, prep["w3"]) + prep["b3"])
    return dot(h, prep["w4"]) + prep["b4"]


def mlp_reference_f32(x, p):
    h = _leaky_relu(x @ p["w1"] + p["b1"])
    h = _leaky_relu(h @ p["w2"] + p["b2"])
    h = _leaky_relu(h @ p["w3"] + p["b3"])
    return h @ p["w4"] + p["b4"]


if __name__ == "__main__":
    input_size, hidden_size, output_size = 16, 32, 8
    batch = 8

    key = jax.random.PRNGKey(0)
    k_params, k_x = jax.random.split(key)
    params = init_params(k_params, input_size, hidden_size, output_size)
    x = jax.random.normal(k_x, (batch, input_size), dtype=jnp.float32)

    # Prepared (padded + bf16-cast) params are computed once and cached here,
    # off the forward path (review #7).
    prep = prepare_params(params)
    prep = jax.tree_util.tree_map(lambda a: a.block_until_ready(), prep)

    y = mlp_forward(x, prep)
    jax.block_until_ready(y)

    assert y.shape == (batch, output_size)

    y_matched = mlp_reference_matched(x, prep)   # identical bf16/f32 mixed math
    y_f32 = mlp_reference_f32(x, params)         # pure-f32 PyTorch semantics

    assert jnp.allclose(y, y_matched, atol=5e-3, rtol=5e-3), "mismatch vs matched ref"
    assert jnp.allclose(y, y_f32, atol=5e-2, rtol=5e-2), "mismatch vs f32 ref"

    print("KERNEL_OK")
</pallas_src>

<mosaic_0001>
module attributes {stable_mosaic.version = 11 : i64} {
  func.func @mlp_kernel(%arg0: i32, %arg1: memref<8x16xf32, #tpu.memory_space<vmem>>, %arg2: memref<16x128xbf16, #tpu.memory_space<vmem>>, %arg3: memref<1x128xf32, #tpu.memory_space<vmem>>, %arg4: memref<128x128xbf16, #tpu.memory_space<vmem>>, %arg5: memref<1x128xf32, #tpu.memory_space<vmem>>, %arg6: memref<128x128xbf16, #tpu.memory_space<vmem>>, %arg7: memref<1x128xf32, #tpu.memory_space<vmem>>, %arg8: memref<128x8xbf16, #tpu.memory_space<vmem>>, %arg9: memref<1x8xf32, #tpu.memory_space<vmem>>, %arg10: memref<8x8xf32, #tpu.memory_space<vmem>>) attributes {dimension_semantics = [#tpu.dimension_semantics<parallel>], iteration_bounds = array<i64: 1>, scalar_prefetch = 0 : i64, scratch_operands = 0 : i64, tpu.core_type = #tpu.core_type<tc>, window_params = [{transform_indices = @transform_0, window_bounds = array<i64: 8, 16>}, {pipeline_mode = #tpu.pipeline_mode<synchronous>, transform_indices = @transform_1, window_bounds = array<i64: 16, 128>}, {pipeline_mode = #tpu.pipeline_mode<synchronous>, transform_indices = @transform_2, window_bounds = array<i64: 1, 128>}, {pipeline_mode = #tpu.pipeline_mode<synchronous>, transform_indices = @transform_3, window_bounds = array<i64: 128, 128>}, {pipeline_mode = #tpu.pipeline_mode<synchronous>, transform_indices = @transform_4, window_bounds = array<i64: 1, 128>}, {pipeline_mode = #tpu.pipeline_mode<synchronous>, transform_indices = @transform_5, window_bounds = array<i64: 128, 128>}, {pipeline_mode = #tpu.pipeline_mode<synchronous>, transform_indices = @transform_6, window_bounds = array<i64: 1, 128>}, {pipeline_mode = #tpu.pipeline_mode<synchronous>, transform_indices = @transform_7, window_bounds = array<i64: 128, 8>}, {pipeline_mode = #tpu.pipeline_mode<synchronous>, transform_indices = @transform_8, window_bounds = array<i64: 1, 8>}, {transform_indices = @transform_9, window_bounds = array<i64: 8, 8>}]} {
    %c0 = arith.constant 0 : index
    %c0_0 = arith.constant 0 : index
    %0 = vector.load %arg1[%c0, %c0_0] : memref<8x16xf32, #tpu.memory_space<vmem>>, vector<8x16xf32>
    %1 = arith.truncf %0 : vector<8x16xf32> to vector<8x16xbf16>
    %c0_1 = arith.constant 0 : index
    %c0_2 = arith.constant 0 : index
    %2 = vector.load %arg2[%c0_1, %c0_2] : memref<16x128xbf16, #tpu.memory_space<vmem>>, vector<16x128xbf16>
    %cst = arith.constant dense<0.000000e+00> : vector<8x128xf32>
    %3 = tpu.matmul %1, %2, %cst {dimension_numbers = #tpu.dot_dimension_numbers<[1], [0], [0], [1], [0, 0, 1, 1], [], []>} : vector<8x16xbf16>, vector<16x128xbf16>, vector<8x128xf32> -> vector<8x128xf32>
    %c0_3 = arith.constant 0 : index
    %c0_4 = arith.constant 0 : index
    %4 = vector.load %arg3[%c0_3, %c0_4] : memref<1x128xf32, #tpu.memory_space<vmem>>, vector<1x128xf32>
    %5 = vector.broadcast %4 : vector<1x128xf32> to vector<8x128xf32>
    %6 = arith.addf %3, %5 : vector<8x128xf32>
    %cst_5 = arith.constant 0.00999999977 : f32
    %7 = vector.broadcast %cst_5 : f32 to vector<8x128xf32>
    %8 = arith.mulf %7, %6 : vector<8x128xf32>
    %9 = arith.maximumf %6, %8 : vector<8x128xf32>
    %10 = arith.truncf %9 : vector<8x128xf32> to vector<8x128xbf16>
    %c0_6 = arith.constant 0 : index
    %c0_7 = arith.constant 0 : index
    %11 = vector.load %arg4[%c0_6, %c0_7] : memref<128x128xbf16, #tpu.memory_space<vmem>>, vector<128x128xbf16>
    %cst_8 = arith.constant dense<0.000000e+00> : vector<8x128xf32>
    %12 = tpu.matmul %10, %11, %cst_8 {dimension_numbers = #tpu.dot_dimension_numbers<[1], [0], [0], [1], [0, 0, 1, 1], [], []>} : vector<8x128xbf16>, vector<128x128xbf16>, vector<8x128xf32> -> vector<8x128xf32>
    %c0_9 = arith.constant 0 : index
    %c0_10 = arith.constant 0 : index
    %13 = vector.load %arg5[%c0_9, %c0_10] : memref<1x128xf32, #tpu.memory_space<vmem>>, vector<1x128xf32>
    %14 = vector.broadcast %13 : vector<1x128xf32> to vector<8x128xf32>
    %15 = arith.addf %12, %14 : vector<8x128xf32>
    %cst_11 = arith.constant 0.00999999977 : f32
    %16 = vector.broadcast %cst_11 : f32 to vector<8x128xf32>
    %17 = arith.mulf %16, %15 : vector<8x128xf32>
    %18 = arith.maximumf %15, %17 : vector<8x128xf32>
    %19 = arith.truncf %18 : vector<8x128xf32> to vector<8x128xbf16>
    %c0_12 = arith.constant 0 : index
    %c0_13 = arith.constant 0 : index
    %20 = vector.load %arg6[%c0_12, %c0_13] : memref<128x128xbf16, #tpu.memory_space<vmem>>, vector<128x128xbf16>
    %cst_14 = arith.constant dense<0.000000e+00> : vector<8x128xf32>
    %21 = tpu.matmul %19, %20, %cst_14 {dimension_numbers = #tpu.dot_dimension_numbers<[1], [0], [0], [1], [0, 0, 1, 1], [], []>} : vector<8x128xbf16>, vector<128x128xbf16>, vector<8x128xf32> -> vector<8x128xf32>
    %c0_15 = arith.constant 0 : index
    %c0_16 = arith.constant 0 : index
    %22 = vector.load %arg7[%c0_15, %c0_16] : memref<1x128xf32, #tpu.memory_space<vmem>>, vector<1x128xf32>
    %23 = vector.broadcast %22 : vector<1x128xf32> to vector<8x128xf32>
    %24 = arith.addf %21, %23 : vector<8x128xf32>
    %cst_17 = arith.constant 0.00999999977 : f32
    %25 = vector.broadcast %cst_17 : f32 to vector<8x128xf32>
    %26 = arith.mulf %25, %24 : vector<8x128xf32>
    %27 = arith.maximumf %24, %26 : vector<8x128xf32>
    %28 = arith.truncf %27 : vector<8x128xf32> to vector<8x128xbf16>
    %c0_18 = arith.constant 0 : index
    %c0_19 = arith.constant 0 : index
    %29 = vector.load %arg8[%c0_18, %c0_19] : memref<128x8xbf16, #tpu.memory_space<vmem>>, vector<128x8xbf16>
    %cst_20 = arith.constant dense<0.000000e+00> : vector<8x8xf32>
    %30 = tpu.matmul %28, %29, %cst_20 {dimension_numbers = #tpu.dot_dimension_numbers<[1], [0], [0], [1], [0, 0, 1, 1], [], []>} : vector<8x128xbf16>, vector<128x8xbf16>, vector<8x8xf32> -> vector<8x8xf32>
    %c0_21 = arith.constant 0 : index
    %c0_22 = arith.constant 0 : index
    %31 = vector.load %arg9[%c0_21, %c0_22] : memref<1x8xf32, #tpu.memory_space<vmem>>, vector<1x8xf32>
    %32 = vector.broadcast %31 : vector<1x8xf32> to vector<8x8xf32>
    %33 = arith.addf %30, %32 : vector<8x8xf32>
    %c0_23 = arith.constant 0 : index
    %c0_24 = arith.constant 0 : index
    %34 = vector.load %arg10[%c0_23, %c0_24] : memref<8x8xf32, #tpu.memory_space<vmem>>, vector<8x8xf32>
    tpu.vector_store %arg10[%c0_23, %c0_24], %33 {strides = array<i32>} : memref<8x8xf32, #tpu.memory_space<vmem>>, vector<8x8xf32>,
    return
  }
  func.func @transform_0(%arg0: i32) -> (i32, i32) {
    %c0_i32 = arith.constant 0 : i32
    %c0_i32_0 = arith.constant 0 : i32
    return %arg0, %c0_i32 : i32, i32
  }
  func.func @transform_1(%arg0: i32) -> (i32, i32) {
    %c0_i32 = arith.constant 0 : i32
    %c0_i32_0 = arith.constant 0 : i32
    %c0_i32_1 = arith.constant 0 : i32
    return %c0_i32, %c0_i32_0 : i32, i32
  }
  func.func @transform_2(%arg0: i32) -> (i32, i32) {
    %c0_i32 = arith.constant 0 : i32
    %c0_i32_0 = arith.constant 0 : i32
    %c0_i32_1 = arith.constant 0 : i32
    return %c0_i32, %c0_i32_0 : i32, i32
  }
  func.func @transform_3(%arg0: i32) -> (i32, i32) {
    %c0_i32 = arith.constant 0 : i32
    %c0_i32_0 = arith.constant 0 : i32
    %c0_i32_1 = arith.constant 0 : i32
    return %c0_i32, %c0_i32_0 : i32, i32
  }
  func.func @transform_4(%arg0: i32) -> (i32, i32) {
    %c0_i32 = arith.constant 0 : i32
    %c0_i32_0 = arith.constant 0 : i32
    %c0_i32_1 = arith.constant 0 : i32
    return %c0_i32, %c0_i32_0 : i32, i32
  }
  func.func @transform_5(%arg0: i32) -> (i32, i32) {
    %c0_i32 = arith.constant 0 : i32
    %c0_i32_0 = arith.constant 0 : i32
    %c0_i32_1 = arith.constant 0 : i32
    return %c0_i32, %c0_i32_0 : i32, i32
  }
  func.func @transform_6(%arg0: i32) -> (i32, i32) {
    %c0_i32 = arith.constant 0 : i32
    %c0_i32_0 = arith.constant 0 : i32
    %c0_i32_1 = arith.constant 0 : i32
    return %c0_i32, %c0_i32_0 : i32, i32
  }
  func.func @transform_7(%arg0: i32) -> (i32, i32) {
    %c0_i32 = arith.constant 0 : i32
    %c0_i32_0 = arith.constant 0 : i32
    %c0_i32_1 = arith.constant 0 : i32
    return %c0_i32, %c0_i32_0 : i32, i32
  }
  func.func @transform_8(%arg0: i32) -> (i32, i32) {
    %c0_i32 = arith.constant 0 : i32
    %c0_i32_0 = arith.constant 0 : i32
    %c0_i32_1 = arith.constant 0 : i32
    return %c0_i32, %c0_i32_0 : i32, i32
  }
  func.func @transform_9(%arg0: i32) -> (i32, i32) {
    %c0_i32 = arith.constant 0 : i32
    %c0_i32_0 = arith.constant 0 : i32
    return %arg0, %c0_i32 : i32, i32
  }
}

module attributes {stable_mosaic.version = 11 : i64} {
  func.func @mlp_kernel(%arg0: i32, %arg1: memref<8x16xf32, #tpu.memory_space<vmem>>, %arg2: memref<16x128xbf16, #tpu.memory_space<vmem>>, %arg3: memref<1x128xf32, #tpu.memory_space<vmem>>, %arg4: memref<128x128xbf16, #tpu.memory_space<vmem>>, %arg5: memref<1x128xf32, #tpu.memory_space<vmem>>, %arg6: memref<128x128xbf16, #tpu.memory_space<vmem>>, %arg7: memref<1x128xf32, #tpu.memory_space<vmem>>, %arg8: memref<128x8xbf16, #tpu.memory_space<vmem>>, %arg9: memref<1x8xf32, #tpu.memory_space<vmem>>, %arg10: memref<8x8xf32, #tpu.memory_space<vmem>>) attributes {dimension_semantics = [#tpu.dimension_semantics<parallel>], iteration_bounds = array<i64: 1>, scalar_prefetch = 0 : i64, scratch_operands = 0 : i64, tpu.core_type = #tpu.core_type<tc>, window_params = [{transform_indices = @transform_0, window_bounds = array<i64: 8, 16>}, {pipeline_mode = #tpu.pipeline_mode<synchronous>, transform_indices = @transform_1, window_bounds = array<i64: 16, 128>}, {pipeline_mode = #tpu.pipeline_mode<synchronous>, transform_indices = @transform_2, window_bounds = array<i64: 1, 128>}, {pipeline_mode = #tpu.pipeline_mode<synchronous>, transform_indices = @transform_3, window_bounds = array<i64: 128, 128>}, {pipeline_mode = #tpu.pipeline_mode<synchronous>, transform_indices = @transform_4, window_bounds = array<i64: 1, 128>}, {pipeline_mode = #tpu.pipeline_mode<synchronous>, transform_indices = @transform_5, window_bounds = array<i64: 128, 128>}, {pipeline_mode = #tpu.pipeline_mode<synchronous>, transform_indices = @transform_6, window_bounds = array<i64: 1, 128>}, {pipeline_mode = #tpu.pipeline_mode<synchronous>, transform_indices = @transform_7, window_bounds = array<i64: 128, 8>}, {pipeline_mode = #tpu.pipeline_mode<synchronous>, transform_indices = @transform_8, window_bounds = array<i64: 1, 8>}, {transform_indices = @transform_9, window_bounds = array<i64: 8, 8>}]} {
    %c0 = arith.constant 0 : index
    %c0_0 = arith.constant 0 : index
    %0 = vector.load %arg1[%c0, %c0_0] : memref<8x16xf32, #tpu.memory_space<vmem>>, vector<8x16xf32>
    %1 = arith.truncf %0 : vector<8x16xf32> to vector<8x16xbf16>
    %c0_1 = arith.constant 0 : index
    %c0_2 = arith.constant 0 : index
    %2 = vector.load %arg2[%c0_1, %c0_2] : memref<16x128xbf16, #tpu.memory_space<vmem>>, vector<16x128xbf16>
    %cst = arith.constant dense<0.000000e+00> : vector<8x128xf32>
    %3 = tpu.matmul %1, %2, %cst {dimension_numbers = #tpu.dot_dimension_numbers<[1], [0], [0], [1], [0, 0, 1, 1], [], []>} : vector<8x16xbf16>, vector<16x128xbf16>, vector<8x128xf32> -> vector<8x128xf32>
    %c0_3 = arith.constant 0 : index
    %c0_4 = arith.constant 0 : index
    %4 = vector.load %arg3[%c0_3, %c0_4] : memref<1x128xf32, #tpu.memory_space<vmem>>, vector<1x128xf32>
    %5 = vector.broadcast %4 : vector<1x128xf32> to vector<8x128xf32>
    %6 = arith.addf %3, %5 : vector<8x128xf32>
    %cst_5 = arith.constant 0.00999999977 : f32
    %7 = vector.broadcast %cst_5 : f32 to vector<8x128xf32>
    %8 = arith.mulf %7, %6 : vector<8x128xf32>
    %9 = arith.maximumf %6, %8 : vector<8x128xf32>
    %10 = arith.truncf %9 : vector<8x128xf32> to vector<8x128xbf16>
    %c0_6 = arith.constant 0 : index
    %c0_7 = arith.constant 0 : index
    %11 = vector.load %arg4[%c0_6, %c0_7] : memref<128x128xbf16, #tpu.memory_space<vmem>>, vector<128x128xbf16>
    %cst_8 = arith.constant dense<0.000000e+00> : vector<8x128xf32>
    %12 = tpu.matmul %10, %11, %cst_8 {dimension_numbers = #tpu.dot_dimension_numbers<[1], [0], [0], [1], [0, 0, 1, 1], [], []>} : vector<8x128xbf16>, vector<128x128xbf16>, vector<8x128xf32> -> vector<8x128xf32>
    %c0_9 = arith.constant 0 : index
    %c0_10 = arith.constant 0 : index
    %13 = vector.load %arg5[%c0_9, %c0_10] : memref<1x128xf32, #tpu.memory_space<vmem>>, vector<1x128xf32>
    %14 = vector.broadcast %13 : vector<1x128xf32> to vector<8x128xf32>
    %15 = arith.addf %12, %14 : vector<8x128xf32>
    %cst_11 = arith.constant 0.00999999977 : f32
    %16 = vector.broadcast %cst_11 : f32 to vector<8x128xf32>
    %17 = arith.mulf %16, %15 : vector<8x128xf32>
    %18 = arith.maximumf %15, %17 : vector<8x128xf32>
    %19 = arith.truncf %18 : vector<8x128xf32> to vector<8x128xbf16>
    %c0_12 = arith.constant 0 : index
    %c0_13 = arith.constant 0 : index
    %20 = vector.load %arg6[%c0_12, %c0_13] : memref<128x128xbf16, #tpu.memory_space<vmem>>, vector<128x128xbf16>
    %cst_14 = arith.constant dense<0.000000e+00> : vector<8x128xf32>
    %21 = tpu.matmul %19, %20, %cst_14 {dimension_numbers = #tpu.dot_dimension_numbers<[1], [0], [0], [1], [0, 0, 1, 1], [], []>} : vector<8x128xbf16>, vector<128x128xbf16>, vector<8x128xf32> -> vector<8x128xf32>
    %c0_15 = arith.constant 0 : index
    %c0_16 = arith.constant 0 : index
    %22 = vector.load %arg7[%c0_15, %c0_16] : memref<1x128xf32, #tpu.memory_space<vmem>>, vector<1x128xf32>
    %23 = vector.broadcast %22 : vector<1x128xf32> to vector<8x128xf32>
    %24 = arith.addf %21, %23 : vector<8x128xf32>
    %cst_17 = arith.constant 0.00999999977 : f32
    %25 = vector.broadcast %cst_17 : f32 to vector<8x128xf32>
    %26 = arith.mulf %25, %24 : vector<8x128xf32>
    %27 = arith.maximumf %24, %26 : vector<8x128xf32>
    %28 = arith.truncf %27 : vector<8x128xf32> to vector<8x128xbf16>
    %c0_18 = arith.constant 0 : index
    %c0_19 = arith.constant 0 : index
    %29 = vector.load %arg8[%c0_18, %c0_19] : memref<128x8xbf16, #tpu.memory_space<vmem>>, vector<128x8xbf16>
    %cst_20 = arith.constant dense<0.000000e+00> : vector<8x8xf32>
    %30 = tpu.matmul %28, %29, %cst_20 {dimension_numbers = #tpu.dot_dimension_numbers<[1], [0], [0], [1], [0, 0, 1, 1], [], []>} : vector<8x128xbf16>, vector<128x8xbf16>, vector<8x8xf32> -> vector<8x8xf32>
    %c0_21 = arith.constant 0 : index
    %c0_22 = arith.constant 0 : index
    %31 = vector.load %arg9[%c0_21, %c0_22] : memref<1x8xf32, #tpu.memory_space<vmem>>, vector<1x8xf32>
    %32 = vector.broadcast %31 : vector<1x8xf32> to vector<8x8xf32>
    %33 = arith.addf %30, %32 : vector<8x8xf32>
    %c0_23 = arith.constant 0 : index
    %c0_24 = arith.constant 0 : index
    %34 = vector.load %arg10[%c0_23, %c0_24] : memref<8x8xf32, #tpu.memory_space<vmem>>, vector<8x8xf32>
    tpu.vector_store %arg10[%c0_23, %c0_24], %33 {strides = array<i32>} : memref<8x8xf32, #tpu.memory_space<vmem>>, vector<8x8xf32>,
    return
  }
  func.func @transform_0(%arg0: i32) -> (i32, i32) {
    %c0_i32 = arith.constant 0 : i32
    %c0_i32_0 = arith.constant 0 : i32
    return %arg0, %c0_i32 : i32, i32
  }
  func.func @transform_1(%arg0: i32) -> (i32, i32) {
    %c0_i32 = arith.constant 0 : i32
    %c0_i32_0 = arith.constant 0 : i32
    %c0_i32_1 = arith.constant 0 : i32
    return %c0_i32, %c0_i32_0 : i32, i32
  }
  func.func @transform_2(%arg0: i32) -> (i32, i32) {
    %c0_i32 = arith.constant 0 : i32
    %c0_i32_0 = arith.constant 0 : i32
    %c0_i32_1 = arith.constant 0 : i32
    return %c0_i32, %c0_i32_0 : i32, i32
  }
  func.func @transform_3(%arg0: i32) -> (i32, i32) {
    %c0_i32 = arith.constant 0 : i32
    %c0_i32_0 = arith.constant 0 : i32
    %c0_i32_1 = arith.constant 0 : i32
    return %c0_i32, %c0_i32_0 : i32, i32
  }
  func.func @transform_4(%arg0: i32) -> (i32, i32) {
    %c0_i32 = arith.constant 0 : i32
    %c0_i32_0 = arith.constant 0 : i32
    %c0_i32_1 = arith.constant 0 : i32
    return %c0_i32, %c0_i32_0 : i32, i32
  }
  func.func @transform_5(%arg0: i32) -> (i32, i32) {
    %c0_i32 = arith.constant 0 : i32
    %c0_i32_0 = arith.constant 0 : i32
    %c0_i32_1 = arith.constant 0 : i32
    return %c0_i32, %c0_i32_0 : i32, i32
  }
  func.func @transform_6(%arg0: i32) -> (i32, i32) {
    %c0_i32 = arith.constant 0 : i32
    %c0_i32_0 = arith.constant 0 : i32
    %c0_i32_1 = arith.constant 0 : i32
    return %c0_i32, %c0_i32_0 : i32, i32
  }
  func.func @transform_7(%arg0: i32) -> (i32, i32) {
    %c0_i32 = arith.constant 0 : i32
    %c0_i32_0 = arith.constant 0 : i32
    %c0_i32_1 = arith.constant 0 : i32
    return %c0_i32, %c0_i32_0 : i32, i32
  }
  func.func @transform_8(%arg0: i32) -> (i32, i32) {
    %c0_i32 = arith.constant 0 : i32
    %c0_i32_0 = arith.constant 0 : i32
    %c0_i32_1 = arith.constant 0 : i32
    return %c0_i32, %c0_i32_0 : i32, i32
  }
  func.func @transform_9(%arg0: i32) -> (i32, i32) {
    %c0_i32 = arith.constant 0 : i32
    %c0_i32_0 = arith.constant 0 : i32
    return %arg0, %c0_i32 : i32, i32
  }
}

</mosaic_0001>

<llo_original>
// kernel: tpu_custom_call.1
$region0: #{tpu_custom_call.1}
  #allocation0 [shape = 'u32[]', space=smem, size = 0x4, offset = 0x4, fixed_abs, tag = 'smem constant byte address 0x4 - core index']
  #allocation1 [shape = 'u32[144,128]{1,0:T(1,128)}', space=vmem, size = 0x12000, scoped, tag = 'internal scratch']
  %s0 = inlined_call_operand.vmem [shape: f32[8,16], index: 0, kind: input, shape index: {}]
  %s1 = inlined_call_operand.hbm [shape: bf16[16,128], index: 1, kind: input, shape index: {}]
  %s2 = inlined_call_operand.vmem [shape: f32[1,128], index: 2, kind: input, shape index: {}]
  %s3 = inlined_call_operand.vmem [shape: bf16[128,128], index: 3, kind: input, shape index: {}]
  %s4 = inlined_call_operand.vmem [shape: f32[1,128], index: 4, kind: input, shape index: {}]
  %s5 = inlined_call_operand.hbm [shape: bf16[128,128], index: 5, kind: input, shape index: {}]
  %s6 = inlined_call_operand.vmem [shape: f32[1,128], index: 6, kind: input, shape index: {}]
  %s7 = inlined_call_operand.vmem [shape: bf16[128,8], index: 7, kind: input, shape index: {}]
  %s8 = inlined_call_operand.vmem [shape: f32[1,8], index: 8, kind: input, shape index: {}]
  %s9 = inlined_call_operand.hbm [shape: f32[8,8], index: 9, kind: output, shape index: {}]
  %s10 = sld [smem:[#allocation0]]
  $region54: #{tpu_custom_call.1} parent=0
    _
  %s12 = ssub.s32 1, %s10
  %s13 = scalar_select 0, %s12, %s10
  $region1: #{tpu_custom_call.1} parent=0
    #allocation2 [shape = 'u8[4096]{0}', space=vmem, size = 0x1000, scoped, tag = 'input window, operand 1, single buffered']
    #allocation3 [shape = 's32[1]{0}', space=sflag, size = 0x4, scoped, tag = 'scoped memory for tpu_custom_call.1']
    #allocation4 [shape = 's32[1]{0}', space=sflag, size = 0x4, scoped, tag = 'scoped memory for tpu_custom_call.1']
    #allocation5 [shape = 'u8[32768]{0}', space=vmem, size = 0x8000, scoped, tag = 'input window, operand 5, single buffered']
    #allocation6 [shape = 's32[1]{0}', space=sflag, size = 0x4, scoped, tag = 'scoped memory for tpu_custom_call.1']
    #allocation7 [shape = 'u8[4096]{0}', space=vmem, size = 0x1000, scoped, tag = 'output window, operand 0, single buffered']
    %14 = vsyncpa [#allocation3], 0
    %15 = vsyncpa [#allocation6], 0
    %16 = vsyncpa [#allocation4], 0
    // Predicated region
    $region2: #{tpu_custom_call.1} parent=1 // pred_check
      _
    $region3: #{tpu_custom_call.1} parent=1 // pred_check_branch
      %18 = sbr.rel (0) target = $region5
    $region4: #{tpu_custom_call.1} parent=1 // pred_region
      _
    $region5: #{tpu_custom_call.1} parent=1 // pred_fallthru
      _
    // Predicated region
    $region6: #{tpu_custom_call.1} parent=1 // pred_check
      _
    $region7: #{tpu_custom_call.1} parent=1 // pred_check_branch
      %20 = sbr.rel (0) target = $region9
    $region8: #{tpu_custom_call.1} parent=1 // pred_region
      %s22 = ssub.s32 128, 128
      %23 = vsyncadd [#allocation3], %s22
      %s24 = sshll.u32 [#allocation2], 4
      %s25 = int_to_ptr.vmem [resolvable:$true] %s24
      %30 = dma.hbm_to_vmem [thread:$0]  %s1, 128, %s25, [#allocation3], 64, 64, 4
    $region9: #{tpu_custom_call.1} parent=1 // pred_fallthru
      _
    // Predicated region
    $region10: #{tpu_custom_call.1} parent=1 // pred_check
      _
    $region11: #{tpu_custom_call.1} parent=1 // pred_check_branch
      %32 = sbr.rel (0) target = $region13
    $region12: #{tpu_custom_call.1} parent=1 // pred_region
      _
    $region13: #{tpu_custom_call.1} parent=1 // pred_fallthru
      _
    // Predicated region
    $region14: #{tpu_custom_call.1} parent=1 // pred_check
      _
    $region15: #{tpu_custom_call.1} parent=1 // pred_check_branch
      %34 = sbr.rel (0) target = $region17
    $region16: #{tpu_custom_call.1} parent=1 // pred_region
      _
    $region17: #{tpu_custom_call.1} parent=1 // pred_fallthru
      _
    // Predicated region
    $region18: #{tpu_custom_call.1} parent=1 // pred_check
      _
    $region19: #{tpu_custom_call.1} parent=1 // pred_check_branch
      %36 = sbr.rel (0) target = $region21
    $region20: #{tpu_custom_call.1} parent=1 // pred_region
      _
    $region21: #{tpu_custom_call.1} parent=1 // pred_fallthru
      _
    // Predicated region
    $region22: #{tpu_custom_call.1} parent=1 // pred_check
      _
    $region23: #{tpu_custom_call.1} parent=1 // pred_check_branch
      %38 = sbr.rel (0) target = $region25
    $region24: #{tpu_custom_call.1} parent=1 // pred_region
      %s40 = ssub.s32 1024, 1024
      %41 = vsyncadd [#allocation6], %s40
      %s42 = sshll.u32 [#allocation5], 4
      %s43 = int_to_ptr.vmem [resolvable:$true] %s42
      %48 = dma.hbm_to_vmem [thread:$0]  %s5, 1024, %s43, [#allocation6], 64, 64, 4
    $region25: #{tpu_custom_call.1} parent=1 // pred_fallthru
      _
    // Predicated region
    $region26: #{tpu_custom_call.1} parent=1 // pred_check
      _
    $region27: #{tpu_custom_call.1} parent=1 // pred_check_branch
      %50 = sbr.rel (0) target = $region29
    $region28: #{tpu_custom_call.1} parent=1 // pred_region
      _
    $region29: #{tpu_custom_call.1} parent=1 // pred_fallthru
      _
    // Predicated region
    $region30: #{tpu_custom_call.1} parent=1 // pred_check
      _
    $region31: #{tpu_custom_call.1} parent=1 // pred_check_branch
      %52 = sbr.rel (0) target = $region33
    $region32: #{tpu_custom_call.1} parent=1 // pred_region
      _
    $region33: #{tpu_custom_call.1} parent=1 // pred_fallthru
      _
    // Predicated region
    $region34: #{tpu_custom_call.1} parent=1 // pred_check
      _
    $region35: #{tpu_custom_call.1} parent=1 // pred_check_branch
      %54 = sbr.rel (0) target = $region37
    $region36: #{tpu_custom_call.1} parent=1 // pred_region
      _
    $region37: #{tpu_custom_call.1} parent=1 // pred_fallthru
      _
    // Predicated region
    $region38: #{tpu_custom_call.1} parent=1 // pred_check
      _
    $region39: #{tpu_custom_call.1} parent=1 // pred_check_branch
      %56 = sbr.rel (0) target = $region41
    $region40: #{tpu_custom_call.1} parent=1 // pred_region
      %57 = dma.done [#allocation3], 128
    $region41: #{tpu_custom_call.1} parent=1 // pred_fallthru
      _
    // Predicated region
    $region42: #{tpu_custom_call.1} parent=1 // pred_check
      _
    $region43: #{tpu_custom_call.1} parent=1 // pred_check_branch
      %59 = sbr.rel (0) target = $region45
    $region44: #{tpu_custom_call.1} parent=1 // pred_region
      %60 = dma.done [#allocation6], 1024
    $region45: #{tpu_custom_call.1} parent=1 // pred_fallthru
      _
    %v62 = vld [vmem:[%s0] sm:$0xff]
    %v63 = vpack.c.bf16 %v62, %v62
    %v64 = vld [vmem:[#allocation2] sm:$0xf]
    %v65 = vld [vmem:[#allocation2 + $0x4] sm:$0xf]
    %v66 = vld [vmem:[%s2] sm:$0x1]
    %v68 = vlaneseq
    %v69 = vshrl.u32 %v68, 7
    %v70 = vsub.s32 0, %v69
    %v71 = vrot.slane %v66, %v70
    %v75 = vunpack.c.l.b16 %v64
    %v76 = vunpack.c.l.b16 %v65
    %v77 = vpack.c.b16 %v76, %v75
    %vm79 = vcmask 130048
    %v81 = vsel %vm79, %v63, 0
    %83 = vmatprep.subr.bf16.mxu0 0
    %84 = vmatpush1.bf16.msra.mxu0 %v77
    %85 = vmatprep.subr.bf16.mxu0 0
    %86 = vmatpush1.bf16.msra.mxu0 0
    %87 = vmatprep.subr.bf16.mxu0 0
    %88 = vmatpush1.bf16.msra.mxu0 0
    %89 = vmatprep.subr.bf16.mxu0 0
    %90 = vmatpush1.bf16.msra.mxu0 0
    %91 = vmatprep.subr.bf16.mxu0 0
    %92 = vmatpush1.bf16.msra.mxu0 0
    %93 = vmatprep.subr.bf16.mxu0 0
    %94 = vmatpush1.bf16.msra.mxu0 0
    %95 = vmatprep.subr.bf16.mxu0 0
    %96 = vmatpush1.bf16.msra.mxu0 0
    %97 = vmatprep.subr.bf16.mxu0 0
    %98 = vmatpush1.bf16.msra.mxu0 0
    %99 = vmatprep.subr.bf16.mxu0 0
    %100 = vmatpush1.bf16.msra.mxu0 0
    %101 = vmatprep.subr.bf16.mxu0 0
    %102 = vmatpush1.bf16.msra.mxu0 0
    %103 = vmatprep.subr.bf16.mxu0 0
    %104 = vmatpush1.bf16.msra.mxu0 0
    %105 = vmatprep.subr.bf16.mxu0 0
    %106 = vmatpush1.bf16.msra.mxu0 0
    %107 = vmatprep.subr.bf16.mxu0 0
    %108 = vmatpush1.bf16.msra.mxu0 0
    %109 = vmatprep.subr.bf16.mxu0 0
    %110 = vmatpush1.bf16.msra.mxu0 0
    %111 = vmatprep.subr.bf16.mxu0 0
    %112 = vmatpush1.bf16.msra.mxu0 0
    %113 = vmatprep.subr.bf16.mxu0 0
    %114 = vmatpush1.bf16.msra.mxu0 0
    %115 = vmatprep.mubr.bf16.mxu0 0
    %116 = vmatmul.mubr.bf16.gmra.mrb[0].mxu0 %v81
    %v117 = vpop.f32.mrb[0].mxu0
    %v118 = vadd.f32 %v71, %v117
    %v119 = vpop.f32.mrb[0].mxu0
    %v120 = vpop.f32.mrb[0].mxu0
    %v121 = vpop.f32.mrb[0].mxu0
    %122 = vdwg.mxu0
    %v123 = vmul.f32 %v118, 0.01
    %v124 = vmax.f32 %v118, %v123
    %v125 = vpack.c.bf16 %v124, %v124
    %v126 = vld [vmem:[%s3] sm:$0xf]
    %v127 = vld [vmem:[%s3 + $0x4] sm:$0xf]
    %v128 = vld [vmem:[%s3 + $0x8] sm:$0xf]
    %v129 = vld [vmem:[%s3 + $0xc] sm:$0xf]
    %v130 = vld [vmem:[%s3 + $0x10] sm:$0xf]
    %v131 = vld [vmem:[%s3 + $0x14] sm:$0xf]
    %v132 = vld [vmem:[%s3 + $0x18] sm:$0xf]
    %v133 = vld [vmem:[%s3 + $0x1c] sm:$0xf]
    %v134 = vld [vmem:[%s3 + $0x20] sm:$0xf]
    %v135 = vld [vmem:[%s3 + $0x24] sm:$0xf]
    %v136 = vld [vmem:[%s3 + $0x28] sm:$0xf]
    %v137 = vld [vmem:[%s3 + $0x2c] sm:$0xf]
    %v138 = vld [vmem:[%s3 + $0x30] sm:$0xf]
    %v139 = vld [vmem:[%s3 + $0x34] sm:$0xf]
    %v140 = vld [vmem:[%s3 + $0x38] sm:$0xf]
    %v141 = vld [vmem:[%s3 + $0x3c] sm:$0xf]
    %v142 = vld [vmem:[%s4] sm:$0x1]
    %v144 = vlaneseq
    %v145 = vshrl.u32 %v144, 7
    %v146 = vsub.s32 0, %v145
    %v147 = vrot.slane %v142, %v146
    %v165 = vunpack.c.l.b16 %v126
    %v166 = vunpack.c.l.b16 %v127
    %v167 = vunpack.c.l.b16 %v128
    %v168 = vunpack.c.l.b16 %v129
    %v169 = vunpack.c.l.b16 %v130
    %v170 = vunpack.c.l.b16 %v131
    %v171 = vunpack.c.l.b16 %v132
    %v172 = vunpack.c.l.b16 %v133
    %v173 = vunpack.c.l.b16 %v134
    %v174 = vunpack.c.l.b16 %v135
    %v175 = vunpack.c.l.b16 %v136
    %v176 = vunpack.c.l.b16 %v137
    %v177 = vunpack.c.l.b16 %v138
    %v178 = vunpack.c.l.b16 %v139
    %v179 = vunpack.c.l.b16 %v140
    %v180 = vunpack.c.l.b16 %v141
    %v181 = vpack.c.b16 %v166, %v165
    %v182 = vpack.c.b16 %v168, %v167
    %v183 = vpack.c.b16 %v170, %v169
    %v184 = vpack.c.b16 %v172, %v171
    %v185 = vpack.c.b16 %v174, %v173
    %v186 = vpack.c.b16 %v176, %v175
    %v187 = vpack.c.b16 %v178, %v177
    %v188 = vpack.c.b16 %v180, %v179
    %197 = vmatprep.subr.bf16.mxu0 0
    %198 = vmatpush1.bf16.msra.mxu0 %v181
    %199 = vmatprep.subr.bf16.mxu0 0
    %200 = vmatpush1.bf16.msra.mxu0 %v182
    %201 = vmatprep.subr.bf16.mxu0 0
    %202 = vmatpush1.bf16.msra.mxu0 %v183
    %203 = vmatprep.subr.bf16.mxu0 0
    %204 = vmatpush1.bf16.msra.mxu0 %v184
    %205 = vmatprep.subr.bf16.mxu0 0
    %206 = vmatpush1.bf16.msra.mxu0 %v185
    %207 = vmatprep.subr.bf16.mxu0 0
    %208 = vmatpush1.bf16.msra.mxu0 %v186
    %209 = vmatprep.subr.bf16.mxu0 0
    %210 = vmatpush1.bf16.msra.mxu0 %v187
    %211 = vmatprep.subr.bf16.mxu0 0
    %212 = vmatpush1.bf16.msra.mxu0 %v188
    %213 = vmatprep.subr.bf16.mxu0 0
    %214 = vmatpush1.bf16.msra.mxu0 0
    %215 = vmatprep.subr.bf16.mxu0 0
    %216 = vmatpush1.bf16.msra.mxu0 0
    %217 = vmatprep.subr.bf16.mxu0 0
    %218 = vmatpush1.bf16.msra.mxu0 0
    %219 = vmatprep.subr.bf16.mxu0 0
    %220 = vmatpush1.bf16.msra.mxu0 0
    %221 = vmatprep.subr.bf16.mxu0 0
    %222 = vmatpush1.bf16.msra.mxu0 0
    %223 = vmatprep.subr.bf16.mxu0 0
    %224 = vmatpush1.bf16.msra.mxu0 0
    %225 = vmatprep.subr.bf16.mxu0 0
    %226 = vmatpush1.bf16.msra.mxu0 0
    %227 = vmatprep.subr.bf16.mxu0 0
    %228 = vmatpush1.bf16.msra.mxu0 0
    %229 = vmatprep.mubr.bf16.mxu0 0
    %230 = vmatmul.mubr.bf16.gmra.mrb[0].mxu0 %v125
    %v231 = vpop.f32.mrb[0].mxu0
    %v232 = vadd.f32 %v147, %v231
    %v233 = vpop.f32.mrb[0].mxu0
    %v234 = vpop.f32.mrb[0].mxu0
    %v235 = vpop.f32.mrb[0].mxu0
    %236 = vdwg.mxu0
    %v237 = vmul.f32 %v232, 0.01
    %v238 = vmax.f32 %v232, %v237
    %v239 = vpack.c.bf16 %v238, %v238
    %v240 = vld [vmem:[#allocation5] sm:$0xf]
    %v241 = vld [vmem:[#allocation5 + $0x4] sm:$0xf]
    %v242 = vld [vmem:[#allocation5 + $0x8] sm:$0xf]
    %v243 = vld [vmem:[#allocation5 + $0xc] sm:$0xf]
    %v244 = vld [vmem:[#allocation5 + $0x10] sm:$0xf]
    %v245 = vld [vmem:[#allocation5 + $0x14] sm:$0xf]
    %v246 = vld [vmem:[#allocation5 + $0x18] sm:$0xf]
    %v247 = vld [vmem:[#allocation5 + $0x1c] sm:$0xf]
    %v248 = vld [vmem:[#allocation5 + $0x20] sm:$0xf]
    %v249 = vld [vmem:[#allocation5 + $0x24] sm:$0xf]
    %v250 = vld [vmem:[#allocation5 + $0x28] sm:$0xf]
    %v251 = vld [vmem:[#allocation5 + $0x2c] sm:$0xf]
    %v252 = vld [vmem:[#allocation5 + $0x30] sm:$0xf]
    %v253 = vld [vmem:[#allocation5 + $0x34] sm:$0xf]
    %v254 = vld [vmem:[#allocation5 + $0x38] sm:$0xf]
    %v255 = vld [vmem:[#allocation5 + $0x3c] sm:$0xf]
    %v256 = vld [vmem:[%s6] sm:$0x1]
    %v258 = vlaneseq
    %v259 = vshrl.u32 %v258, 7
    %v260 = vsub.s32 0, %v259
    %v261 = vrot.slane %v256, %v260
    %v279 = vunpack.c.l.b16 %v240
    %v280 = vunpack.c.l.b16 %v241
    %v281 = vunpack.c.l.b16 %v242
    %v282 = vunpack.c.l.b16 %v243
    %v283 = vunpack.c.l.b16 %v244
    %v284 = vunpack.c.l.b16 %v245
    %v285 = vunpack.c.l.b16 %v246
    %v286 = vunpack.c.l.b16 %v247
    %v287 = vunpack.c.l.b16 %v248
    %v288 = vunpack.c.l.b16 %v249
    %v289 = vunpack.c.l.b16 %v250
    %v290 = vunpack.c.l.b16 %v251
    %v291 = vunpack.c.l.b16 %v252
    %v292 = vunpack.c.l.b16 %v253
    %v293 = vunpack.c.l.b16 %v254
    %v294 = vunpack.c.l.b16 %v255
    %v295 = vpack.c.b16 %v280, %v279
    %v296 = vpack.c.b16 %v282, %v281
    %v297 = vpack.c.b16 %v284, %v283
    %v298 = vpack.c.b16 %v286, %v285
    %v299 = vpack.c.b16 %v288, %v287
    %v300 = vpack.c.b16 %v290, %v289
    %v301 = vpack.c.b16 %v292, %v291
    %v302 = vpack.c.b16 %v294, %v293
    %311 = vmatprep.subr.bf16.mxu0 0
    %312 = vmatpush1.bf16.msra.mxu0 %v295
    %313 = vmatprep.subr.bf16.mxu0 0
    %314 = vmatpush1.bf16.msra.mxu0 %v296
    %315 = vmatprep.subr.bf16.mxu0 0
    %316 = vmatpush1.bf16.msra.mxu0 %v297
    %317 = vmatprep.subr.bf16.mxu0 0
    %318 = vmatpush1.bf16.msra.mxu0 %v298
    %319 = vmatprep.subr.bf16.mxu0 0
    %320 = vmatpush1.bf16.msra.mxu0 %v299
    %321 = vmatprep.subr.bf16.mxu0 0
    %322 = vmatpush1.bf16.msra.mxu0 %v300
    %323 = vmatprep.subr.bf16.mxu0 0
    %324 = vmatpush1.bf16.msra.mxu0 %v301
    %325 = vmatprep.subr.bf16.mxu0 0
    %326 = vmatpush1.bf16.msra.mxu0 %v302
    %327 = vmatprep.subr.bf16.mxu0 0
    %328 = vmatpush1.bf16.msra.mxu0 0
    %329 = vmatprep.subr.bf16.mxu0 0
    %330 = vmatpush1.bf16.msra.mxu0 0
    %331 = vmatprep.subr.bf16.mxu0 0
    %332 = vmatpush1.bf16.msra.mxu0 0
    %333 = vmatprep.subr.bf16.mxu0 0
    %334 = vmatpush1.bf16.msra.mxu0 0
    %335 = vmatprep.subr.bf16.mxu0 0
    %336 = vmatpush1.bf16.msra.mxu0 0
    %337 = vmatprep.subr.bf16.mxu0 0
    %338 = vmatpush1.bf16.msra.mxu0 0
    %339 = vmatprep.subr.bf16.mxu0 0
    %340 = vmatpush1.bf16.msra.mxu0 0
    %341 = vmatprep.subr.bf16.mxu0 0
    %342 = vmatpush1.bf16.msra.mxu0 0
    %343 = vmatprep.mubr.bf16.mxu0 0
    %344 = vmatmul.mubr.bf16.gmra.mrb[0].mxu0 %v239
    %v345 = vpop.f32.mrb[0].mxu0
    %v346 = vadd.f32 %v261, %v345
    %v347 = vpop.f32.mrb[0].mxu0
    %v348 = vpop.f32.mrb[0].mxu0
    %v349 = vpop.f32.mrb[0].mxu0
    %350 = vdwg.mxu0
    %v351 = vmul.f32 %v346, 0.01
    %v352 = vmax.f32 %v346, %v351
    %v353 = vpack.c.bf16 %v352, %v352
    %v354 = vld [vmem:[%s7] sm:$0xf]
    %v355 = vld [vmem:[%s7 + $0x4] sm:$0xf]
    %v356 = vld [vmem:[%s7 + $0x8] sm:$0xf]
    %v357 = vld [vmem:[%s7 + $0xc] sm:$0xf]
    %v358 = vld [vmem:[%s7 + $0x10] sm:$0xf]
    %v359 = vld [vmem:[%s7 + $0x14] sm:$0xf]
    %v360 = vld [vmem:[%s7 + $0x18] sm:$0xf]
    %v361 = vld [vmem:[%s7 + $0x1c] sm:$0xf]
    %v362 = vld [vmem:[%s7 + $0x20] sm:$0xf]
    %v363 = vld [vmem:[%s7 + $0x24] sm:$0xf]
    %v364 = vld [vmem:[%s7 + $0x28] sm:$0xf]
    %v365 = vld [vmem:[%s7 + $0x2c] sm:$0xf]
    %v366 = vld [vmem:[%s7 + $0x30] sm:$0xf]
    %v367 = vld [vmem:[%s7 + $0x34] sm:$0xf]
    %v368 = vld [vmem:[%s7 + $0x38] sm:$0xf]
    %v369 = vld [vmem:[%s7 + $0x3c] sm:$0xf]
    %v370 = vld [vmem:[%s8] sm:$0x1]
    %v372 = vlaneseq
    %v373 = vshrl.u32 %v372, 7
    %v374 = vsub.s32 0, %v373
    %v375 = vrot.slane %v370, %v374
    %v393 = vunpack.c.l.b16 %v354
    %v394 = vunpack.c.l.b16 %v355
    %v395 = vunpack.c.l.b16 %v356
    %v396 = vunpack.c.l.b16 %v357
    %v397 = vunpack.c.l.b16 %v358
    %v398 = vunpack.c.l.b16 %v359
    %v399 = vunpack.c.l.b16 %v360
    %v400 = vunpack.c.l.b16 %v361
    %v401 = vunpack.c.l.b16 %v362
    %v402 = vunpack.c.l.b16 %v363
    %v403 = vunpack.c.l.b16 %v364
    %v404 = vunpack.c.l.b16 %v365
    %v405 = vunpack.c.l.b16 %v366
    %v406 = vunpack.c.l.b16 %v367
    %v407 = vunpack.c.l.b16 %v368
    %v408 = vunpack.c.l.b16 %v369
    %v409 = vpack.c.b16 %v394, %v393
    %v410 = vpack.c.b16 %v396, %v395
    %v411 = vpack.c.b16 %v398, %v397
    %v412 = vpack.c.b16 %v400, %v399
    %v413 = vpack.c.b16 %v402, %v401
    %v414 = vpack.c.b16 %v404, %v403
    %v415 = vpack.c.b16 %v406, %v405
    %v416 = vpack.c.b16 %v408, %v407
    %425 = vmatprep.subr.bf16.mxu0 0
    %426 = vmatpush1.bf16.msra.mxu0 %v409
    %427 = vmatprep.subr.bf16.mxu0 0
    %428 = vmatpush1.bf16.msra.mxu0 %v410
    %429 = vmatprep.subr.bf16.mxu0 0
    %430 = vmatpush1.bf16.msra.mxu0 %v411
    %431 = vmatprep.subr.bf16.mxu0 0
    %432 = vmatpush1.bf16.msra.mxu0 %v412
    %433 = vmatprep.subr.bf16.mxu0 0
    %434 = vmatpush1.bf16.msra.mxu0 %v413
    %435 = vmatprep.subr.bf16.mxu0 0
    %436 = vmatpush1.bf16.msra.mxu0 %v414
    %437 = vmatprep.subr.bf16.mxu0 0
    %438 = vmatpush1.bf16.msra.mxu0 %v415
    %439 = vmatprep.subr.bf16.mxu0 0
    %440 = vmatpush1.bf16.msra.mxu0 %v416
    %441 = vmatprep.subr.bf16.mxu0 0
    %442 = vmatpush1.bf16.msra.mxu0 0
    %443 = vmatprep.subr.bf16.mxu0 0
    %444 = vmatpush1.bf16.msra.mxu0 0
    %445 = vmatprep.subr.bf16.mxu0 0
    %446 = vmatpush1.bf16.msra.mxu0 0
    %447 = vmatprep.subr.bf16.mxu0 0
    %448 = vmatpush1.bf16.msra.mxu0 0
    %449 = vmatprep.subr.bf16.mxu0 0
    %450 = vmatpush1.bf16.msra.mxu0 0
    %451 = vmatprep.subr.bf16.mxu0 0
    %452 = vmatpush1.bf16.msra.mxu0 0
    %453 = vmatprep.subr.bf16.mxu0 0
    %454 = vmatpush1.bf16.msra.mxu0 0
    %455 = vmatprep.subr.bf16.mxu0 0
    %456 = vmatpush1.bf16.msra.mxu0 0
    %457 = vmatprep.mubr.bf16.mxu0 0
    %458 = vmatmul.mubr.bf16.gmra.mrb[0].mxu0 %v353
    %v459 = vpop.f32.mrb[0].mxu0
    %v460 = vadd.f32 %v375, %v459
    %v461 = vpop.f32.mrb[0].mxu0
    %v462 = vpop.f32.mrb[0].mxu0
    %v463 = vpop.f32.mrb[0].mxu0
    %464 = vdwg.mxu0
    %vm465 = vcmask 64512
    %466 = vst.msk [vmem:[#allocation7] sm:$0xff] %vm465, %v460
    // Predicated region
    $region46: #{tpu_custom_call.1} parent=1 // pred_check
      _
    $region47: #{tpu_custom_call.1} parent=1 // pred_check_branch
      %468 = sbr.rel (0) target = $region49
    $region48: #{tpu_custom_call.1} parent=1 // pred_region
      %s470 = ssub.s32 128, 128
      %471 = vsyncadd [#allocation4], %s470
      %s473 = sshll.u32 [#allocation7], 4
      %s474 = int_to_ptr.vmem [resolvable:$true] %s473
      %476 = dma.vmem_to_hbm [thread:$0]  %s474, 128, %s9, [#allocation4]
    $region49: #{tpu_custom_call.1} parent=1 // pred_fallthru
      _
    // Predicated region
    $region50: #{tpu_custom_call.1} parent=1 // pred_check
      _
    $region51: #{tpu_custom_call.1} parent=1 // pred_check_branch
      %478 = sbr.rel (0) target = $region53
    $region52: #{tpu_custom_call.1} parent=1 // pred_region
      %479 = dma.done [#allocation4], 128
    $region53: #{tpu_custom_call.1} parent=1 // pred_fallthru
      _
    %480 = vsyncpa [#allocation3], 1
    %481 = vsyncpa [#allocation6], 1
    %482 = vsyncpa [#allocation4], 1

// kernel: tpu_custom_call.1
$region0: #{tpu_custom_call.1}
  #allocation0 [shape = 'u32[]', space=smem, size = 0x4, offset = 0x4, fixed_abs, tag = 'smem constant byte address 0x4 - core index']
  #allocation1 [shape = 'u32[144,128]{1,0:T(1,128)}', space=vmem, size = 0x12000, scoped, tag = 'internal scratch']
  %s0 = inlined_call_operand.vmem [shape: f32[8,16], index: 0, kind: input, shape index: {}]
  %s1 = inlined_call_operand.hbm [shape: bf16[16,128], index: 1, kind: input, shape index: {}]
  %s2 = inlined_call_operand.vmem [shape: f32[1,128], index: 2, kind: input, shape index: {}]
  %s3 = inlined_call_operand.vmem [shape: bf16[128,128], index: 3, kind: input, shape index: {}]
  %s4 = inlined_call_operand.vmem [shape: f32[1,128], index: 4, kind: input, shape index: {}]
  %s5 = inlined_call_operand.hbm [shape: bf16[128,128], index: 5, kind: input, shape index: {}]
  %s6 = inlined_call_operand.vmem [shape: f32[1,128], index: 6, kind: input, shape index: {}]
  %s7 = inlined_call_operand.vmem [shape: bf16[128,8], index: 7, kind: input, shape index: {}]
  %s8 = inlined_call_operand.vmem [shape: f32[1,8], index: 8, kind: input, shape index: {}]
  %s9 = inlined_call_operand.hbm [shape: f32[8,8], index: 9, kind: output, shape index: {}]
  %s10 = sld [smem:[#allocation0]]
  $region54: #{tpu_custom_call.1} parent=0
    _
  %s12 = ssub.s32 1, %s10
  %s13 = scalar_select 0, %s12, %s10
  $region1: #{tpu_custom_call.1} parent=0
    #allocation2 [shape = 'u8[4096]{0}', space=vmem, size = 0x1000, scoped, tag = 'input window, operand 1, single buffered']
    #allocation3 [shape = 's32[1]{0}', space=sflag, size = 0x4, scoped, tag = 'scoped memory for tpu_custom_call.1']
    #allocation4 [shape = 's32[1]{0}', space=sflag, size = 0x4, scoped, tag = 'scoped memory for tpu_custom_call.1']
    #allocation5 [shape = 'u8[32768]{0}', space=vmem, size = 0x8000, scoped, tag = 'input window, operand 5, single buffered']
    #allocation6 [shape = 's32[1]{0}', space=sflag, size = 0x4, scoped, tag = 'scoped memory for tpu_custom_call.1']
    #allocation7 [shape = 'u8[4096]{0}', space=vmem, size = 0x1000, scoped, tag = 'output window, operand 0, single buffered']
    %14 = vsyncpa [#allocation3], 0
    %15 = vsyncpa [#allocation6], 0
    %16 = vsyncpa [#allocation4], 0
    // Predicated region
    $region2: #{tpu_custom_call.1} parent=1 // pred_check
      _
    $region3: #{tpu_custom_call.1} parent=1 // pred_check_branch
      %18 = sbr.rel (0) target = $region5
    $region4: #{tpu_custom_call.1} parent=1 // pred_region
      _
    $region5: #{tpu_custom_call.1} parent=1 // pred_fallthru
      _
    // Predicated region
    $region6: #{tpu_custom_call.1} parent=1 // pred_check
      _
    $region7: #{tpu_custom_call.1} parent=1 // pred_check_branch
      %20 = sbr.rel (0) target = $region9
    $region8: #{tpu_custom_call.1} parent=1 // pred_region
      %s22 = ssub.s32 128, 128
      %23 = vsyncadd [#allocation3], %s22
      %s24 = sshll.u32 [#allocation2], 4
      %s25 = int_to_ptr.vmem [resolvable:$true] %s24
      %30 = dma.hbm_to_vmem [thread:$0]  %s1, 128, %s25, [#allocation3], 64, 64, 4
    $region9: #{tpu_custom_call.1} parent=1 // pred_fallthru
      _
    // Predicated region
    $region10: #{tpu_custom_call.1} parent=1 // pred_check
      _
    $region11: #{tpu_custom_call.1} parent=1 // pred_check_branch
      %32 = sbr.rel (0) target = $region13
    $region12: #{tpu_custom_call.1} parent=1 // pred_region
      _
    $region13: #{tpu_custom_call.1} parent=1 // pred_fallthru
      _
    // Predicated region
    $region14: #{tpu_custom_call.1} parent=1 // pred_check
      _
    $region15: #{tpu_custom_call.1} parent=1 // pred_check_branch
      %34 = sbr.rel (0) target = $region17
    $region16: #{tpu_custom_call.1} parent=1 // pred_region
      _
    $region17: #{tpu_custom_call.1} parent=1 // pred_fallthru
      _
    // Predicated region
    $region18: #{tpu_custom_call.1} parent=1 // pred_check
      _
    $region19: #{tpu_custom_call.1} parent=1 // pred_check_branch
      %36 = sbr.rel (0) target = $region21
    $region20: #{tpu_custom_call.1} parent=1 // pred_region
      _
    $region21: #{tpu_custom_call.1} parent=1 // pred_fallthru
      _
    // Predicated region
    $region22: #{tpu_custom_call.1} parent=1 // pred_check
      _
    $region23: #{tpu_custom_call.1} parent=1 // pred_check_branch
      %38 = sbr.rel (0) target = $region25
    $region24: #{tpu_custom_call.1} parent=1 // pred_region
      %s40 = ssub.s32 1024, 1024
      %41 = vsyncadd [#allocation6], %s40
      %s42 = sshll.u32 [#allocation5], 4
      %s43 = int_to_ptr.vmem [resolvable:$true] %s42
      %48 = dma.hbm_to_vmem [thread:$0]  %s5, 1024, %s43, [#allocation6], 64, 64, 4
    $region25: #{tpu_custom_call.1} parent=1 // pred_fallthru
      _
    // Predicated region
    $region26: #{tpu_custom_call.1} parent=1 // pred_check
      _
    $region27: #{tpu_custom_call.1} parent=1 // pred_check_branch
      %50 = sbr.rel (0) target = $region29
    $region28: #{tpu_custom_call.1} parent=1 // pred_region
      _
    $region29: #{tpu_custom_call.1} parent=1 // pred_fallthru
      _
    // Predicated region
    $region30: #{tpu_custom_call.1} parent=1 // pred_check
      _
    $region31: #{tpu_custom_call.1} parent=1 // pred_check_branch
      %52 = sbr.rel (0) target = $region33
    $region32: #{tpu_custom_call.1} parent=1 // pred_region
      _
    $region33: #{tpu_custom_call.1} parent=1 // pred_fallthru
      _
    // Predicated region
    $region34: #{tpu_custom_call.1} parent=1 // pred_check
      _
    $region35: #{tpu_custom_call.1} parent=1 // pred_check_branch
      %54 = sbr.rel (0) target = $region37
    $region36: #{tpu_custom_call.1} parent=1 // pred_region
      _
    $region37: #{tpu_custom_call.1} parent=1 // pred_fallthru
      _
    // Predicated region
    $region38: #{tpu_custom_call.1} parent=1 // pred_check
      _
    $region39: #{tpu_custom_call.1} parent=1 // pred_check_branch
      %56 = sbr.rel (0) target = $region41
    $region40: #{tpu_custom_call.1} parent=1 // pred_region
      %57 = dma.done [#allocation3], 128
    $region41: #{tpu_custom_call.1} parent=1 // pred_fallthru
      _
    // Predicated region
    $region42: #{tpu_custom_call.1} parent=1 // pred_check
      _
    $region43: #{tpu_custom_call.1} parent=1 // pred_check_branch
      %59 = sbr.rel (0) target = $region45
    $region44: #{tpu_custom_call.1} parent=1 // pred_region
      %60 = dma.done [#allocation6], 1024
    $region45: #{tpu_custom_call.1} parent=1 // pred_fallthru
      _
    %v62 = vld [vmem:[%s0] sm:$0xff]
    %v63 = vpack.c.bf16 %v62, %v62
    %v64 = vld [vmem:[#allocation2] sm:$0xf]
    %v65 = vld [vmem:[#allocation2 + $0x4] sm:$0xf]
    %v66 = vld [vmem:[%s2] sm:$0x1]
    %v68 = vlaneseq
    %v69 = vshrl.u32 %v68, 7
    %v70 = vsub.s32 0, %v69
    %v71 = vrot.slane %v66, %v70
    %v75 = vunpack.c.l.b16 %v64
    %v76 = vunpack.c.l.b16 %v65
    %v77 = vpack.c.b16 %v76, %v75
    %vm79 = vcmask 130048
    %v81 = vsel %vm79, %v63, 0
    %83 = vmatprep.subr.bf16.mxu0 0
    %84 = vmatpush1.bf16.msra.mxu0 %v77
    %85 = vmatprep.subr.bf16.mxu0 0
    %86 = vmatpush1.bf16.msra.mxu0 0
    %87 = vmatprep.subr.bf16.mxu0 0
    %88 = vmatpush1.bf16.msra.mxu0 0
    %89 = vmatprep.subr.bf16.mxu0 0
    %90 = vmatpush1.bf16.msra.mxu0 0
    %91 = vmatprep.subr.bf16.mxu0 0
    %92 = vmatpush1.bf16.msra.mxu0 0
    %93 = vmatprep.subr.bf16.mxu0 0
    %94 = vmatpush1.bf16.msra.mxu0 0
    %95 = vmatprep.subr.bf16.mxu0 0
    %96 = vmatpush1.bf16.msra.mxu0 0
    %97 = vmatprep.subr.bf16.mxu0 0
    %98 = vmatpush1.bf16.msra.mxu0 0
    %99 = vmatprep.subr.bf16.mxu0 0
    %100 = vmatpush1.bf16.msra.mxu0 0
    %101 = vmatprep.subr.bf16.mxu0 0
    %102 = vmatpush1.bf16.msra.mxu0 0
    %103 = vmatprep.subr.bf16.mxu0 0
    %104 = vmatpush1.bf16.msra.mxu0 0
    %105 = vmatprep.subr.bf16.mxu0 0
    %106 = vmatpush1.bf16.msra.mxu0 0
    %107 = vmatprep.subr.bf16.mxu0 0
    %108 = vmatpush1.bf16.msra.mxu0 0
    %109 = vmatprep.subr.bf16.mxu0 0
    %110 = vmatpush1.bf16.msra.mxu0 0
    %111 = vmatprep.subr.bf16.mxu0 0
    %112 = vmatpush1.bf16.msra.mxu0 0
    %113 = vmatprep.subr.bf16.mxu0 0
    %114 = vmatpush1.bf16.msra.mxu0 0
    %115 = vmatprep.mubr.bf16.mxu0 0
    %116 = vmatmul.mubr.bf16.gmra.mrb[0].mxu0 %v81
    %v117 = vpop.f32.mrb[0].mxu0
    %v118 = vadd.f32 %v71, %v117
    %v119 = vpop.f32.mrb[0].mxu0
    %v120 = vpop.f32.mrb[0].mxu0
    %v121 = vpop.f32.mrb[0].mxu0
    %122 = vdwg.mxu0
    %v123 = vmul.f32 %v118, 0.01
    %v124 = vmax.f32 %v118, %v123
    %v125 = vpack.c.bf16 %v124, %v124
    %v126 = vld [vmem:[%s3] sm:$0xf]
    %v127 = vld [vmem:[%s3 + $0x4] sm:$0xf]
    %v128 = vld [vmem:[%s3 + $0x8] sm:$0xf]
    %v129 = vld [vmem:[%s3 + $0xc] sm:$0xf]
    %v130 = vld [vmem:[%s3 + $0x10] sm:$0xf]
    %v131 = vld [vmem:[%s3 + $0x14] sm:$0xf]
    %v132 = vld [vmem:[%s3 + $0x18] sm:$0xf]
    %v133 = vld [vmem:[%s3 + $0x1c] sm:$0xf]
    %v134 = vld [vmem:[%s3 + $0x20] sm:$0xf]
    %v135 = vld [vmem:[%s3 + $0x24] sm:$0xf]
    %v136 = vld [vmem:[%s3 + $0x28] sm:$0xf]
    %v137 = vld [vmem:[%s3 + $0x2c] sm:$0xf]
    %v138 = vld [vmem:[%s3 + $0x30] sm:$0xf]
    %v139 = vld [vmem:[%s3 + $0x34] sm:$0xf]
    %v140 = vld [vmem:[%s3 + $0x38] sm:$0xf]
    %v141 = vld [vmem:[%s3 + $0x3c] sm:$0xf]
    %v142 = vld [vmem:[%s4] sm:$0x1]
    %v144 = vlaneseq
    %v145 = vshrl.u32 %v144, 7
    %v146 = vsub.s32 0, %v145
    %v147 = vrot.slane %v142, %v146
    %v165 = vunpack.c.l.b16 %v126
    %v166 = vunpack.c.l.b16 %v127
    %v167 = vunpack.c.l.b16 %v128
    %v168 = vunpack.c.l.b16 %v129
    %v169 = vunpack.c.l.b16 %v130
    %v170 = vunpack.c.l.b16 %v131
    %v171 = vunpack.c.l.b16 %v132
    %v172 = vunpack.c.l.b16 %v133
    %v173 = vunpack.c.l.b16 %v134
    %v174 = vunpack.c.l.b16 %v135
    %v175 = vunpack.c.l.b16 %v136
    %v176 = vunpack.c.l.b16 %v137
    %v177 = vunpack.c.l.b16 %v138
    %v178 = vunpack.c.l.b16 %v139
    %v179 = vunpack.c.l.b16 %v140
    %v180 = vunpack.c.l.b16 %v141
    %v181 = vpack.c.b16 %v166, %v165
    %v182 = vpack.c.b16 %v168, %v167
    %v183 = vpack.c.b16 %v170, %v169
    %v184 = vpack.c.b16 %v172, %v171
    %v185 = vpack.c.b16 %v174, %v173
    %v186 = vpack.c.b16 %v176, %v175
    %v187 = vpack.c.b16 %v178, %v177
    %v188 = vpack.c.b16 %v180, %v179
    %197 = vmatprep.subr.bf16.mxu0 0
    %198 = vmatpush1.bf16.msra.mxu0 %v181
    %199 = vmatprep.subr.bf16.mxu0 0
    %200 = vmatpush1.bf16.msra.mxu0 %v182
    %201 = vmatprep.subr.bf16.mxu0 0
    %202 = vmatpush1.bf16.msra.mxu0 %v183
    %203 = vmatprep.subr.bf16.mxu0 0
    %204 = vmatpush1.bf16.msra.mxu0 %v184
    %205 = vmatprep.subr.bf16.mxu0 0
    %206 = vmatpush1.bf16.msra.mxu0 %v185
    %207 = vmatprep.subr.bf16.mxu0 0
    %208 = vmatpush1.bf16.msra.mxu0 %v186
    %209 = vmatprep.subr.bf16.mxu0 0
    %210 = vmatpush1.bf16.msra.mxu0 %v187
    %211 = vmatprep.subr.bf16.mxu0 0
    %212 = vmatpush1.bf16.msra.mxu0 %v188
    %213 = vmatprep.subr.bf16.mxu0 0
    %214 = vmatpush1.bf16.msra.mxu0 0
    %215 = vmatprep.subr.bf16.mxu0 0
    %216 = vmatpush1.bf16.msra.mxu0 0
    %217 = vmatprep.subr.bf16.mxu0 0
    %218 = vmatpush1.bf16.msra.mxu0 0
    %219 = vmatprep.subr.bf16.mxu0 0
    %220 = vmatpush1.bf16.msra.mxu0 0
    %221 = vmatprep.subr.bf16.mxu0 0
    %222 = vmatpush1.bf16.msra.mxu0 0
    %223 = vmatprep.subr.bf16.mxu0 0
    %224 = vmatpush1.bf16.msra.mxu0 0
    %225 = vmatprep.subr.bf16.mxu0 0
    %226 = vmatpush1.bf16.msra.mxu0 0
    %227 = vmatprep.subr.bf16.mxu0 0
    %228 = vmatpush1.bf16.msra.mxu0 0
    %229 = vmatprep.mubr.bf16.mxu0 0
    %230 = vmatmul.mubr.bf16.gmra.mrb[0].mxu0 %v125
    %v231 = vpop.f32.mrb[0].mxu0
    %v232 = vadd.f32 %v147, %v231
    %v233 = vpop.f32.mrb[0].mxu0
    %v234 = vpop.f32.mrb[0].mxu0
    %v235 = vpop.f32.mrb[0].mxu0
    %236 = vdwg.mxu0
    %v237 = vmul.f32 %v232, 0.01
    %v238 = vmax.f32 %v232, %v237
    %v239 = vpack.c.bf16 %v238, %v238
    %v240 = vld [vmem:[#allocation5] sm:$0xf]
    %v241 = vld [vmem:[#allocation5 + $0x4] sm:$0xf]
    %v242 = vld [vmem:[#allocation5 + $0x8] sm:$0xf]
    %v243 = vld [vmem:[#allocation5 + $0xc] sm:$0xf]
    %v244 = vld [vmem:[#allocation5 + $0x10] sm:$0xf]
    %v245 = vld [vmem:[#allocation5 + $0x14] sm:$0xf]
    %v246 = vld [vmem:[#allocation5 + $0x18] sm:$0xf]
    %v247 = vld [vmem:[#allocation5 + $0x1c] sm:$0xf]
    %v248 = vld [vmem:[#allocation5 + $0x20] sm:$0xf]
    %v249 = vld [vmem:[#allocation5 + $0x24] sm:$0xf]
    %v250 = vld [vmem:[#allocation5 + $0x28] sm:$0xf]
    %v251 = vld [vmem:[#allocation5 + $0x2c] sm:$0xf]
    %v252 = vld [vmem:[#allocation5 + $0x30] sm:$0xf]
    %v253 = vld [vmem:[#allocation5 + $0x34] sm:$0xf]
    %v254 = vld [vmem:[#allocation5 + $0x38] sm:$0xf]
    %v255 = vld [vmem:[#allocation5 + $0x3c] sm:$0xf]
    %v256 = vld [vmem:[%s6] sm:$0x1]
    %v258 = vlaneseq
    %v259 = vshrl.u32 %v258, 7
    %v260 = vsub.s32 0, %v259
    %v261 = vrot.slane %v256, %v260
    %v279 = vunpack.c.l.b16 %v240
    %v280 = vunpack.c.l.b16 %v241
    %v281 = vunpack.c.l.b16 %v242
    %v282 = vunpack.c.l.b16 %v243
    %v283 = vunpack.c.l.b16 %v244
    %v284 = vunpack.c.l.b16 %v245
    %v285 = vunpack.c.l.b16 %v246
    %v286 = vunpack.c.l.b16 %v247
    %v287 = vunpack.c.l.b16 %v248
    %v288 = vunpack.c.l.b16 %v249
    %v289 = vunpack.c.l.b16 %v250
    %v290 = vunpack.c.l.b16 %v251
    %v291 = vunpack.c.l.b16 %v252
    %v292 = vunpack.c.l.b16 %v253
    %v293 = vunpack.c.l.b16 %v254
    %v294 = vunpack.c.l.b16 %v255
    %v295 = vpack.c.b16 %v280, %v279
    %v296 = vpack.c.b16 %v282, %v281
    %v297 = vpack.c.b16 %v284, %v283
    %v298 = vpack.c.b16 %v286, %v285
    %v299 = vpack.c.b16 %v288, %v287
    %v300 = vpack.c.b16 %v290, %v289
    %v301 = vpack.c.b16 %v292, %v291
    %v302 = vpack.c.b16 %v294, %v293
    %311 = vmatprep.subr.bf16.mxu0 0
    %312 = vmatpush1.bf16.msra.mxu0 %v295
    %313 = vmatprep.subr.bf16.mxu0 0
    %314 = vmatpush1.bf16.msra.mxu0 %v296
    %315 = vmatprep.subr.bf16.mxu0 0
    %316 = vmatpush1.bf16.msra.mxu0 %v297
    %317 = vmatprep.subr.bf16.mxu0 0
    %318 = vmatpush1.bf16.msra.mxu0 %v298
    %319 = vmatprep.subr.bf16.mxu0 0
    %320 = vmatpush1.bf16.msra.mxu0 %v299
    %321 = vmatprep.subr.bf16.mxu0 0
    %322 = vmatpush1.bf16.msra.mxu0 %v300
    %323 = vmatprep.subr.bf16.mxu0 0
    %324 = vmatpush1.bf16.msra.mxu0 %v301
    %325 = vmatprep.subr.bf16.mxu0 0
    %326 = vmatpush1.bf16.msra.mxu0 %v302
    %327 = vmatprep.subr.bf16.mxu0 0
    %328 = vmatpush1.bf16.msra.mxu0 0
    %329 = vmatprep.subr.bf16.mxu0 0
    %330 = vmatpush1.bf16.msra.mxu0 0
    %331 = vmatprep.subr.bf16.mxu0 0
    %332 = vmatpush1.bf16.msra.mxu0 0
    %333 = vmatprep.subr.bf16.mxu0 0
    %334 = vmatpush1.bf16.msra.mxu0 0
    %335 = vmatprep.subr.bf16.mxu0 0
    %336 = vmatpush1.bf16.msra.mxu0 0
    %337 = vmatprep.subr.bf16.mxu0 0
    %338 = vmatpush1.bf16.msra.mxu0 0
    %339 = vmatprep.subr.bf16.mxu0 0
    %340 = vmatpush1.bf16.msra.mxu0 0
    %341 = vmatprep.subr.bf16.mxu0 0
    %342 = vmatpush1.bf16.msra.mxu0 0
    %343 = vmatprep.mubr.bf16.mxu0 0
    %344 = vmatmul.mubr.bf16.gmra.mrb[0].mxu0 %v239
    %v345 = vpop.f32.mrb[0].mxu0
    %v346 = vadd.f32 %v261, %v345
    %v347 = vpop.f32.mrb[0].mxu0
    %v348 = vpop.f32.mrb[0].mxu0
    %v349 = vpop.f32.mrb[0].mxu0
    %350 = vdwg.mxu0
    %v351 = vmul.f32 %v346, 0.01
    %v352 = vmax.f32 %v346, %v351
    %v353 = vpack.c.bf16 %v352, %v352
    %v354 = vld [vmem:[%s7] sm:$0xf]
    %v355 = vld [vmem:[%s7 + $0x4] sm:$0xf]
    %v356 = vld [vmem:[%s7 + $0x8] sm:$0xf]
    %v357 = vld [vmem:[%s7 + $0xc] sm:$0xf]
    %v358 = vld [vmem:[%s7 + $0x10] sm:$0xf]
    %v359 = vld [vmem:[%s7 + $0x14] sm:$0xf]
    %v360 = vld [vmem:[%s7 + $0x18] sm:$0xf]
    %v361 = vld [vmem:[%s7 + $0x1c] sm:$0xf]
    %v362 = vld [vmem:[%s7 + $0x20] sm:$0xf]
    %v363 = vld [vmem:[%s7 + $0x24] sm:$0xf]
    %v364 = vld [vmem:[%s7 + $0x28] sm:$0xf]
    %v365 = vld [vmem:[%s7 + $0x2c] sm:$0xf]
    %v366 = vld [vmem:[%s7 + $0x30] sm:$0xf]
    %v367 = vld [vmem:[%s7 + $0x34] sm:$0xf]
    %v368 = vld [vmem:[%s7 + $0x38] sm:$0xf]
    %v369 = vld [vmem:[%s7 + $0x3c] sm:$0xf]
    %v370 = vld [vmem:[%s8] sm:$0x1]
    %v372 = vlaneseq
    %v373 = vshrl.u32 %v372, 7
    %v374 = vsub.s32 0, %v373
    %v375 = vrot.slane %v370, %v374
    %v393 = vunpack.c.l.b16 %v354
    %v394 = vunpack.c.l.b16 %v355
    %v395 = vunpack.c.l.b16 %v356
    %v396 = vunpack.c.l.b16 %v357
    %v397 = vunpack.c.l.b16 %v358
    %v398 = vunpack.c.l.b16 %v359
    %v399 = vunpack.c.l.b16 %v360
    %v400 = vunpack.c.l.b16 %v361
    %v401 = vunpack.c.l.b16 %v362
    %v402 = vunpack.c.l.b16 %v363
    %v403 = vunpack.c.l.b16 %v364
    %v404 = vunpack.c.l.b16 %v365
    %v405 = vunpack.c.l.b16 %v366
    %v406 = vunpack.c.l.b16 %v367
    %v407 = vunpack.c.l.b16 %v368
    %v408 = vunpack.c.l.b16 %v369
    %v409 = vpack.c.b16 %v394, %v393
    %v410 = vpack.c.b16 %v396, %v395
    %v411 = vpack.c.b16 %v398, %v397
    %v412 = vpack.c.b16 %v400, %v399
    %v413 = vpack.c.b16 %v402, %v401
    %v414 = vpack.c.b16 %v404, %v403
    %v415 = vpack.c.b16 %v406, %v405
    %v416 = vpack.c.b16 %v408, %v407
    %425 = vmatprep.subr.bf16.mxu0 0
    %426 = vmatpush1.bf16.msra.mxu0 %v409
    %427 = vmatprep.subr.bf16.mxu0 0
    %428 = vmatpush1.bf16.msra.mxu0 %v410
    %429 = vmatprep.subr.bf16.mxu0 0
    %430 = vmatpush1.bf16.msra.mxu0 %v411
    %431 = vmatprep.subr.bf16.mxu0 0
    %432 = vmatpush1.bf16.msra.mxu0 %v412
    %433 = vmatprep.subr.bf16.mxu0 0
    %434 = vmatpush1.bf16.msra.mxu0 %v413
    %435 = vmatprep.subr.bf16.mxu0 0
    %436 = vmatpush1.bf16.msra.mxu0 %v414
    %437 = vmatprep.subr.bf16.mxu0 0
    %438 = vmatpush1.bf16.msra.mxu0 %v415
    %439 = vmatprep.subr.bf16.mxu0 0
    %440 = vmatpush1.bf16.msra.mxu0 %v416
    %441 = vmatprep.subr.bf16.mxu0 0
    %442 = vmatpush1.bf16.msra.mxu0 0
    %443 = vmatprep.subr.bf16.mxu0 0
    %444 = vmatpush1.bf16.msra.mxu0 0
    %445 = vmatprep.subr.bf16.mxu0 0
    %446 = vmatpush1.bf16.msra.mxu0 0
    %447 = vmatprep.subr.bf16.mxu0 0
    %448 = vmatpush1.bf16.msra.mxu0 0
    %449 = vmatprep.subr.bf16.mxu0 0
    %450 = vmatpush1.bf16.msra.mxu0 0
    %451 = vmatprep.subr.bf16.mxu0 0
    %452 = vmatpush1.bf16.msra.mxu0 0
    %453 = vmatprep.subr.bf16.mxu0 0
    %454 = vmatpush1.bf16.msra.mxu0 0
    %455 = vmatprep.subr.bf16.mxu0 0
    %456 = vmatpush1.bf16.msra.mxu0 0
    %457 = vmatprep.mubr.bf16.mxu0 0
    %458 = vmatmul.mubr.bf16.gmra.mrb[0].mxu0 %v353
    %v459 = vpop.f32.mrb[0].mxu0
    %v460 = vadd.f32 %v375, %v459
    %v461 = vpop.f32.mrb[0].mxu0
    %v462 = vpop.f32.mrb[0].mxu0
    %v463 = vpop.f32.mrb[0].mxu0
    %464 = vdwg.mxu0
    %vm465 = vcmask 64512
    %466 = vst.msk [vmem:[#allocation7] sm:$0xff] %vm465, %v460
    // Predicated region
    $region46: #{tpu_custom_call.1} parent=1 // pred_check
      _
    $region47: #{tpu_custom_call.1} parent=1 // pred_check_branch
      %468 = sbr.rel (0) target = $region49
    $region48: #{tpu_custom_call.1} parent=1 // pred_region
      %s470 = ssub.s32 128, 128
      %471 = vsyncadd [#allocation4], %s470
      %s473 = sshll.u32 [#allocation7], 4
      %s474 = int_to_ptr.vmem [resolvable:$true] %s473
      %476 = dma.vmem_to_hbm [thread:$0]  %s474, 128, %s9, [#allocation4]
    $region49: #{tpu_custom_call.1} parent=1 // pred_fallthru
      _
    // Predicated region
    $region50: #{tpu_custom_call.1} parent=1 // pred_check
      _
    $region51: #{tpu_custom_call.1} parent=1 // pred_check_branch
      %478 = sbr.rel (0) target = $region53
    $region52: #{tpu_custom_call.1} parent=1 // pred_region
      %479 = dma.done [#allocation4], 128
    $region53: #{tpu_custom_call.1} parent=1 // pred_fallthru
      _
    %480 = vsyncpa [#allocation3], 1
    %481 = vsyncpa [#allocation6], 1
    %482 = vsyncpa [#allocation4], 1

</llo_original>
